<compile_context>
chip_gen: v5e
topology: v5e:2x2
jax: 0.10.0
libtpu: 0.0.40
codegen_flags: <defaults>
</compile_context>

<pallas_src>
import jax
import jax.numpy as jnp
from jax.experimental import pallas as pl
from jax.experimental.pallas import tpu as pltpu

_LANE = 128


def _round_up(x, m):
    return ((x + m - 1) // m) * m


def _padded_nodes(n):
    """Padded node count: multiple of 128 (small graphs) else multiple of 512.

    A function of N alone, so one prepared adjacency is reusable by every layer
    regardless of that layer's output width.
    """
    if n <= 512:
        return _round_up(n, _LANE)
    return _round_up(n, 512)


def _vmem_capacity_bytes():
    try:
        return int(pltpu.get_tpu_info().vmem_capacity_bytes)
    except Exception:  # interpret mode / older runtimes
        return 64 * 1024 * 1024  # conservative: v7x per-TensorCore VMEM


def _choose_node_tiles(n_p, f_out_p, itemsize, budget_bytes):
    """Largest (tm, tk) node/contraction tiles (multiples of 128 dividing n_p)
    whose double-buffered working set fits the VMEM budget."""
    cands = [c for c in (2048, 1024, 512, 256, 128) if c <= n_p and n_p % c == 0]

    def need(tm, tk):
        return (2 * (tm * tk + tk * f_out_p) * itemsize  # adj & xw tiles, double-buffered
                + 2 * tm * f_out_p * 4                   # f32 output tile, double-buffered
                + tm * f_out_p * 4                       # f32 accumulator scratch
                + 2 * f_out_p * 4                        # bias row
                + (1 << 20))                             # headroom

    for tm in cands:          # prefer large node tiles (fewer output writebacks) ...
        for tk in cands:      # ... then deep contraction tiles (fewer grid steps)
            if need(tm, tk) <= budget_bytes:
                return tm, tk
    raise ValueError(
        "GraphConv tiles do not fit VMEM: even "
        f"({cands[-1]}, {cands[-1]}) needs {need(cands[-1], cands[-1])} bytes "
        f"> budget {budget_bytes} bytes (F_out too large?).")


def prepare_adjacency(adj, *, mxu_dtype=jnp.bfloat16):
    """Pad adj to the kernel layout and cast it to the MXU streaming dtype.

    adj is static in a GCN: call this ONCE and pass the result to every
    graph_conv_layer call (adj_prepared=...) so the full-N^2 pad/cast HBM pass
    is not repeated per layer / per forward pass.
    """
    n = adj.shape[0]
    n_p = _padded_nodes(n)
    dt = jnp.dtype(mxu_dtype) if mxu_dtype is not None else jnp.dtype(jnp.float32)
    if n_p != n:
        adj = jnp.pad(adj, ((0, n_p - n), (0, n_p - n)))
    return adj.astype(dt)


def _gcn_aggregate_kernel(adj_ref, xw_ref, b_ref, o_ref, acc_ref):
    """out[i] = sum_k adj[i, k] @ xw[k] + b   (f32 accumulation in VMEM scratch)."""
    k = pl.program_id(1)

    @pl.when(k == 0)
    def _():
        acc_ref[...] = jnp.zeros_like(acc_ref)

    acc_ref[...] += jnp.dot(adj_ref[...], xw_ref[...],
                            preferred_element_type=jnp.float32)

    @pl.when(k == pl.num_programs(1) - 1)
    def _():
        # Fused f32 bias epilogue (VPU slot is free under the MXU-bound matmul).
        o_ref[...] = (acc_ref[...] + b_ref[...]).astype(o_ref.dtype)


def graph_conv_layer(x, adj, weight, bias, *, adj_prepared=None,
                     mxu_dtype=jnp.bfloat16, use_pallas=None,
                     small_graph_threshold=256):
    """Pallas implementation of GraphConvLayer.forward(x, adj).

    x:      [N, F_in]
    adj:    [N, N]
    weight: [F_out, F_in]   (PyTorch nn.Linear convention)
    bias:   [F_out]
    adj_prepared: optional result of prepare_adjacency(adj), reusable across layers.
    mxu_dtype: dtype streamed through the MXU (bf16 default, f32 accumulation);
               pass jnp.float32 for a bit-close match to the f32 reference.
    returns [N, F_out] in x.dtype
    """
    n, f_in = x.shape
    f_out = weight.shape[0]
    out_dtype = x.dtype

    # Hoisted projection: xw = x @ W^T once, in f32 (O(N*F) vs the O(N^2) aggregation).
    xw = jnp.dot(x.astype(jnp.float32), weight.T.astype(jnp.float32),
                 preferred_element_type=jnp.float32)
    bias_f32 = bias.astype(jnp.float32)

    if use_pallas is None:
        use_pallas = n >= small_graph_threshold
    if not use_pallas:
        # Small-graph fast path: kernel launch + 128-padding would dominate.
        out = jnp.dot(adj.astype(jnp.float32), xw) + bias_f32
        return out.astype(out_dtype)

    compute_dtype = (jnp.dtype(mxu_dtype) if mxu_dtype is not None
                     else jnp.dtype(jnp.float32))
    itemsize = compute_dtype.itemsize

    n_p = _padded_nodes(n)
    f_out_p = _round_up(f_out, _LANE)

    if adj_prepared is None:
        adj_prepared = prepare_adjacency(adj, mxu_dtype=compute_dtype)
    if adj_prepared.shape != (n_p, n_p):
        raise ValueError(
            f"adj_prepared has shape {adj_prepared.shape}, expected {(n_p, n_p)}; "
            "build it with prepare_adjacency(adj).")
    if adj_prepared.dtype != compute_dtype:
        adj_prepared = adj_prepared.astype(compute_dtype)

    # NOTE: xw is accumulated in f32 and then cast to the MXU streaming dtype;
    # with bf16 this is a second rounding vs a pure bf16-in/f32-acc composite.
    # Use mxu_dtype=jnp.float32 when bit-closeness to the reference matters.
    if (n_p, f_out_p) != (n, f_out):
        xw = jnp.pad(xw, ((0, n_p - n), (0, f_out_p - f_out)))
    xw_p = xw.astype(compute_dtype)

    b_p = bias_f32.reshape(1, f_out)
    if f_out_p != f_out:
        b_p = jnp.pad(b_p, ((0, 0), (0, f_out_p - f_out)))

    # Generation-aware VMEM budgeting (v5e/v6e: 128 MiB, v7x: 64 MiB per core).
    vmem_cap = _vmem_capacity_bytes()
    tile_budget = (vmem_cap * 70) // 100
    tm, tk = _choose_node_tiles(n_p, f_out_p, itemsize, tile_budget)
    vmem_limit = int(min(max((vmem_cap * 85) // 100, 32 << 20), 112 << 20))

    cost = pl.CostEstimate(
        flops=2 * n_p * n_p * f_out_p,
        transcendentals=0,
        bytes_accessed=(n_p * n_p * itemsize                      # adj streamed once
                        + (n_p // tm) * n_p * f_out_p * itemsize  # xw re-read per row-slab
                        + n_p * f_out_p * 4                       # f32 output
                        + f_out_p * 4),                           # bias
    )

    out_p = pl.pallas_call(
        _gcn_aggregate_kernel,
        out_shape=jax.ShapeDtypeStruct((n_p, f_out_p), jnp.float32),
        grid_spec=pltpu.PrefetchScalarGridSpec(
            num_scalar_prefetch=0,
            grid=(n_p // tm, n_p // tk),
            in_specs=[
                pl.BlockSpec((tm, tk), lambda i, k: (i, k)),        # adj tile
                pl.BlockSpec((tk, f_out_p), lambda i, k: (k, 0)),   # xw K-slab
                pl.BlockSpec((1, f_out_p), lambda i, k: (0, 0)),    # bias (tiny, constant)
            ],
            out_specs=pl.BlockSpec((tm, f_out_p), lambda i, k: (i, 0)),
            scratch_shapes=[pltpu.VMEM((tm, f_out_p), jnp.float32)],
        ),
        compiler_params=pltpu.CompilerParams(
            dimension_semantics=("parallel", "arbitrary"),
            vmem_limit_bytes=vmem_limit,
        ),
        cost_estimate=cost,
    )(adj_prepared, xw_p, b_p)

    # Strip padding back to the logical [N, F_out] result.
    return out_p[:n, :f_out].astype(out_dtype)


if __name__ == "__main__":
    key = jax.random.PRNGKey(0)
    ks = jax.random.split(key, 10)

    # ---- Case 1: the module's own config (num_nodes=10, 32 -> 32 features) ----
    num_nodes, in_features, out_features = 10, 32, 32
    x = jax.random.normal(ks[0], (num_nodes, in_features), dtype=jnp.float32)
    adj = jax.random.uniform(ks[1], (num_nodes, num_nodes), dtype=jnp.float32)
    bound = 1.0 / (in_features ** 0.5)
    weight = jax.random.uniform(ks[2], (out_features, in_features),
                                minval=-bound, maxval=bound, dtype=jnp.float32)
    bias = jax.random.uniform(ks[3], (out_features,), minval=-bound,
                              maxval=bound, dtype=jnp.float32)

    ref = jnp.dot(jnp.dot(adj, x), weight.T) + bias

    # Forced through the Pallas kernel in exact-f32 streaming mode.
    out = graph_conv_layer(x, adj, weight, bias,
                           mxu_dtype=jnp.float32, use_pallas=True)
    out = jax.block_until_ready(out)
    assert out.shape == (num_nodes, out_features)
    assert jnp.allclose(out, ref, atol=1e-4, rtol=1e-4)

    # Default call for a 10-node graph takes the small-graph XLA fast path.
    out_fast = jax.block_until_ready(graph_conv_layer(x, adj, weight, bias))
    assert jnp.allclose(out_fast, ref, atol=1e-4, rtol=1e-4)

    # ---- Case 2: multi-tile grid (node + contraction tiling), default bf16 ----
    # streaming, cached pre-padded adjacency shared across two layer widths.
    n2, f_in2, f_out2a, f_out2b = 384, 32, 32, 64
    x2 = jax.random.normal(ks[4], (n2, f_in2), dtype=jnp.float32)
    adj2 = jax.random.uniform(ks[5], (n2, n2), dtype=jnp.float32) / n2
    w2a = jax.random.uniform(ks[6], (f_out2a, f_in2), minval=-bound,
                             maxval=bound, dtype=jnp.float32)
    b2a = jax.random.uniform(ks[7], (f_out2a,), minval=-bound, maxval=bound,
                             dtype=jnp.float32)
    w2b = jax.random.uniform(ks[8], (f_out2b, f_in2), minval=-bound,
                             maxval=bound, dtype=jnp.float32)
    b2b = jax.random.uniform(ks[9], (f_out2b,), minval=-bound, maxval=bound,
                             dtype=jnp.float32)

    adj2_prep = prepare_adjacency(adj2, mxu_dtype=jnp.bfloat16)  # pad+cast once
    out2a = jax.block_until_ready(
        graph_conv_layer(x2, adj2, w2a, b2a, adj_prepared=adj2_prep))
    out2b = jax.block_until_ready(
        graph_conv_layer(x2, adj2, w2b, b2b, adj_prepared=adj2_prep))

    ref2a = jnp.dot(jnp.dot(adj2, x2), w2a.T) + b2a
    ref2b = jnp.dot(jnp.dot(adj2, x2), w2b.T) + b2b
    assert out2a.shape == (n2, f_out2a) and out2b.shape == (n2, f_out2b)
    assert jnp.allclose(out2a, ref2a, atol=3e-2, rtol=3e-2)   # bf16 streaming
    assert jnp.allclose(out2b, ref2b, atol=3e-2, rtol=3e-2)

    print("KERNEL_OK")
</pallas_src>

<mosaic_0001>
module attributes {stable_mosaic.version = 11 : i64} {
  func.func @_gcn_aggregate_kernel(%arg0: i32, %arg1: i32, %arg2: memref<128x128xf32, #tpu.memory_space<vmem>>, %arg3: memref<128x128xf32, #tpu.memory_space<vmem>>, %arg4: memref<1x128xf32, #tpu.memory_space<vmem>>, %arg5: memref<128x128xf32, #tpu.memory_space<vmem>>, %arg6: memref<128x128xf32, #tpu.memory_space<vmem>>) attributes {dimension_semantics = [#tpu.dimension_semantics<parallel>, #tpu.dimension_semantics<arbitrary>], iteration_bounds = array<i64: 1, 1>, scalar_prefetch = 0 : i64, scratch_operands = 1 : i64, tpu.core_type = #tpu.core_type<tc>, window_params = [{transform_indices = @transform_0, window_bounds = array<i64: 128, 128>}, {transform_indices = @transform_1, window_bounds = array<i64: 128, 128>}, {pipeline_mode = #tpu.pipeline_mode<synchronous>, transform_indices = @transform_2, window_bounds = array<i64: 1, 128>}, {transform_indices = @transform_3, window_bounds = array<i64: 128, 128>}]} {
    %c0_i32 = arith.constant 0 : i32
    %0 = arith.cmpi eq, %arg1, %c0_i32 : i32
    %1 = arith.extui %0 : i1 to i32
    %c0_i32_0 = arith.constant 0 : i32
    %2 = arith.cmpi ne, %1, %c0_i32_0 : i32
    scf.if %2 {
      %cst_10 = arith.constant 0.000000e+00 : f32
      %12 = vector.broadcast %cst_10 : f32 to vector<128x128xf32>
      %c0_11 = arith.constant 0 : index
      %c0_12 = arith.constant 0 : index
      %13 = vector.load %arg6[%c0_11, %c0_12] : memref<128x128xf32, #tpu.memory_space<vmem>>, vector<128x128xf32>
      tpu.vector_store %arg6[%c0_11, %c0_12], %12 {strides = array<i32>} : memref<128x128xf32, #tpu.memory_space<vmem>>, vector<128x128xf32>,
    } else {
    }
    %c0 = arith.constant 0 : index
    %c0_1 = arith.constant 0 : index
    %3 = vector.load %arg6[%c0, %c0_1] : memref<128x128xf32, #tpu.memory_space<vmem>>, vector<128x128xf32>
    %c0_2 = arith.constant 0 : index
    %c0_3 = arith.constant 0 : index
    %4 = vector.load %arg2[%c0_2, %c0_3] : memref<128x128xf32, #tpu.memory_space<vmem>>, vector<128x128xf32>
    %c0_4 = arith.constant 0 : index
    %c0_5 = arith.constant 0 : index
    %5 = vector.load %arg3[%c0_4, %c0_5] : memref<128x128xf32, #tpu.memory_space<vmem>>, vector<128x128xf32>
    %cst = arith.constant dense<0.000000e+00> : vector<128x128xf32>
    %6 = tpu.matmul %4, %5, %cst {dimension_numbers = #tpu.dot_dimension_numbers<[1], [0], [0], [1], [0, 0, 1, 1], [], []>} : vector<128x128xf32>, vector<128x128xf32>, vector<128x128xf32> -> vector<128x128xf32>
    %7 = arith.addf %3, %6 : vector<128x128xf32>
    %c0_6 = arith.constant 0 : index
    %c0_7 = arith.constant 0 : index
    %8 = vector.load %arg6[%c0_6, %c0_7] : memref<128x128xf32, #tpu.memory_space<vmem>>, vector<128x128xf32>
    tpu.vector_store %arg6[%c0_6, %c0_7], %7 {strides = array<i32>} : memref<128x128xf32, #tpu.memory_space<vmem>>, vector<128x128xf32>,
    %c0_i32_8 = arith.constant 0 : i32
    %9 = arith.cmpi eq, %arg1, %c0_i32_8 : i32
    %10 = arith.extui %9 : i1 to i32
    %c0_i32_9 = arith.constant 0 : i32
    %11 = arith.cmpi ne, %10, %c0_i32_9 : i32
    scf.if %11 {
      %c0_10 = arith.constant 0 : index
      %c0_11 = arith.constant 0 : index
      %12 = vector.load %arg6[%c0_10, %c0_11] : memref<128x128xf32, #tpu.memory_space<vmem>>, vector<128x128xf32>
      %c0_12 = arith.constant 0 : index
      %c0_13 = arith.constant 0 : index
      %13 = vector.load %arg4[%c0_12, %c0_13] : memref<1x128xf32, #tpu.memory_space<vmem>>, vector<1x128xf32>
      %14 = vector.broadcast %13 : vector<1x128xf32> to vector<128x128xf32>
      %15 = arith.addf %12, %14 : vector<128x128xf32>
      %c0_14 = arith.constant 0 : index
      %c0_15 = arith.constant 0 : index
      %16 = vector.load %arg5[%c0_14, %c0_15] : memref<128x128xf32, #tpu.memory_space<vmem>>, vector<128x128xf32>
      tpu.vector_store %arg5[%c0_14, %c0_15], %15 {strides = array<i32>} : memref<128x128xf32, #tpu.memory_space<vmem>>, vector<128x128xf32>,
    } else {
    }
    return
  }
  func.func @transform_0(%arg0: i32, %arg1: i32) -> (i32, i32) {
    %c0_i32 = arith.constant 0 : i32
    return %arg0, %arg1 : i32, i32
  }
  func.func @transform_1(%arg0: i32, %arg1: i32) -> (i32, i32) {
    %c0_i32 = arith.constant 0 : i32
    %c0_i32_0 = arith.constant 0 : i32
    return %arg1, %c0_i32 : i32, i32
  }
  func.func @transform_2(%arg0: i32, %arg1: i32) -> (i32, i32) {
    %c0_i32 = arith.constant 0 : i32
    %c0_i32_0 = arith.constant 0 : i32
    %c0_i32_1 = arith.constant 0 : i32
    return %c0_i32, %c0_i32_0 : i32, i32
  }
  func.func @transform_3(%arg0: i32, %arg1: i32) -> (i32, i32) {
    %c0_i32 = arith.constant 0 : i32
    %c0_i32_0 = arith.constant 0 : i32
    return %arg0, %c0_i32 : i32, i32
  }
}

</mosaic_0001>

<llo_original>
// kernel: tpu_custom_call.1
$region0: #{tpu_custom_call.1}
  #allocation0 [shape = 'u32[]', space=smem, size = 0x4, offset = 0x4, fixed_abs, tag = 'smem constant byte address 0x4 - core index']
  #allocation1 [shape = 'u32[72,128]{1,0:T(1,128)}', space=vmem, size = 0x9000, scoped, tag = 'internal scratch']
  #allocation2 [shape = 'f32[128,128]{1,0:T(8,128)}', space=vmem, size = 0x10000, scoped, tag = 'scratch operand']
  %s0 = inlined_call_operand.hbm [shape: f32[128,128], index: 0, kind: input, shape index: {}]
  %s1 = inlined_call_operand.hbm [shape: f32[128,128], index: 1, kind: input, shape index: {}]
  %s2 = inlined_call_operand.vmem [shape: f32[1,128], index: 2, kind: input, shape index: {}]
  %s3 = inlined_call_operand.hbm [shape: f32[128,128], index: 3, kind: output, shape index: {}]
  %s4 = sld [smem:[#allocation0]]
  $region38: #{tpu_custom_call.1} parent=0
    _
  %s6 = ssub.s32 1, %s4
  %s7 = scalar_select 0, %s6, %s4
  $region1: #{tpu_custom_call.1} parent=0
    #allocation3 [shape = 'u8[65536]{0}', space=vmem, size = 0x10000, scoped, tag = 'input window, operand 0, single buffered']
    #allocation4 [shape = 's32[1]{0}', space=sflag, size = 0x4, scoped, tag = 'scoped memory for tpu_custom_call.1']
    #allocation5 [shape = 's32[1]{0}', space=sflag, size = 0x4, scoped, tag = 'scoped memory for tpu_custom_call.1']
    #allocation6 [shape = 'u8[65536]{0}', space=vmem, size = 0x10000, scoped, tag = 'input window, operand 1, single buffered']
    #allocation7 [shape = 's32[1]{0}', space=sflag, size = 0x4, scoped, tag = 'scoped memory for tpu_custom_call.1']
    #allocation8 [shape = 'u8[65536]{0}', space=vmem, size = 0x10000, scoped, tag = 'output window, operand 0, single buffered']
    %8 = vsyncpa [#allocation4], 0
    %9 = vsyncpa [#allocation7], 0
    %10 = vsyncpa [#allocation5], 0
    // Predicated region
    $region2: #{tpu_custom_call.1} parent=1 // pred_check
      _
    $region3: #{tpu_custom_call.1} parent=1 // pred_check_branch
      %12 = sbr.rel (0) target = $region5
    $region4: #{tpu_custom_call.1} parent=1 // pred_region
      %14 = vsyncadd [#allocation4], 0
      %s15 = sshll.u32 %s0, 4
      %s16 = int_to_ptr.hbm [resolvable:$true] %s15
      %s17 = sshll.u32 [#allocation3], 4
      %s18 = int_to_ptr.vmem [resolvable:$true] %s17
      %23 = dma.hbm_to_vmem [thread:$0]  %s16, 2048, %s18, [#allocation4], 128, 128, 8
    $region5: #{tpu_custom_call.1} parent=1 // pred_fallthru
      _
    // Predicated region
    $region6: #{tpu_custom_call.1} parent=1 // pred_check
      _
    $region7: #{tpu_custom_call.1} parent=1 // pred_check_branch
      %25 = sbr.rel (0) target = $region9
    $region8: #{tpu_custom_call.1} parent=1 // pred_region
      %27 = vsyncadd [#allocation7], 0
      %s28 = sshll.u32 %s1, 4
      %s29 = int_to_ptr.hbm [resolvable:$true] %s28
      %s30 = sshll.u32 [#allocation6], 4
      %s31 = int_to_ptr.vmem [resolvable:$true] %s30
      %36 = dma.hbm_to_vmem [thread:$0]  %s29, 2048, %s31, [#allocation7], 128, 128, 8
    $region9: #{tpu_custom_call.1} parent=1 // pred_fallthru
      _
    // Predicated region
    $region10: #{tpu_custom_call.1} parent=1 // pred_check
      _
    $region11: #{tpu_custom_call.1} parent=1 // pred_check_branch
      %38 = sbr.rel (0) target = $region13
    $region12: #{tpu_custom_call.1} parent=1 // pred_region
      _
    $region13: #{tpu_custom_call.1} parent=1 // pred_fallthru
      _
    // Predicated region
    $region14: #{tpu_custom_call.1} parent=1 // pred_check
      _
    $region15: #{tpu_custom_call.1} parent=1 // pred_check_branch
      %40 = sbr.rel (0) target = $region17
    $region16: #{tpu_custom_call.1} parent=1 // pred_region
      %42 = dma.done [#allocation4], 2048
    $region17: #{tpu_custom_call.1} parent=1 // pred_fallthru
      _
    // Predicated region
    $region18: #{tpu_custom_call.1} parent=1 // pred_check
      _
    $region19: #{tpu_custom_call.1} parent=1 // pred_check_branch
      %44 = sbr.rel (0) target = $region21
    $region20: #{tpu_custom_call.1} parent=1 // pred_region
      %46 = dma.done [#allocation7], 2048
    $region21: #{tpu_custom_call.1} parent=1 // pred_fallthru
      _
    %p47 = scmp.eq.s32.totalorder 0, 0
    // Predicated region
    $region22: #{tpu_custom_call.1} parent=1 // pred_check
      %p48 = pneg %p47
    $region23: #{tpu_custom_call.1} parent=1 // pred_check_branch
      %50 = sbr.rel (%p48) target = $region25
    $region24: #{tpu_custom_call.1} parent=1 // pred_region
      %51 = vst [vmem:[#allocation2] sm:$0xff] 0.0
      %52 = vst [vmem:[#allocation2 + $0x8] sm:$0xff] 0.0
      %53 = vst [vmem:[#allocation2 + $0x10] sm:$0xff] 0.0
      %54 = vst [vmem:[#allocation2 + $0x18] sm:$0xff] 0.0
      %55 = vst [vmem:[#allocation2 + $0x20] sm:$0xff] 0.0
      %56 = vst [vmem:[#allocation2 + $0x28] sm:$0xff] 0.0
      %57 = vst [vmem:[#allocation2 + $0x30] sm:$0xff] 0.0
      %58 = vst [vmem:[#allocation2 + $0x38] sm:$0xff] 0.0
      %59 = vst [vmem:[#allocation2 + $0x40] sm:$0xff] 0.0
      %60 = vst [vmem:[#allocation2 + $0x48] sm:$0xff] 0.0
      %61 = vst [vmem:[#allocation2 + $0x50] sm:$0xff] 0.0
      %62 = vst [vmem:[#allocation2 + $0x58] sm:$0xff] 0.0
      %63 = vst [vmem:[#allocation2 + $0x60] sm:$0xff] 0.0
      %64 = vst [vmem:[#allocation2 + $0x68] sm:$0xff] 0.0
      %65 = vst [vmem:[#allocation2 + $0x70] sm:$0xff] 0.0
      %66 = vst [vmem:[#allocation2 + $0x78] sm:$0xff] 0.0
    $region25: #{tpu_custom_call.1} parent=1 // pred_fallthru
      _
    %v67 = vld [vmem:[#allocation2] sm:$0xff]
    %v68 = vld [vmem:[#allocation2 + $0x8] sm:$0xff]
    %v69 = vld [vmem:[#allocation2 + $0x10] sm:$0xff]
    %v70 = vld [vmem:[#allocation2 + $0x18] sm:$0xff]
    %v71 = vld [vmem:[#allocation2 + $0x20] sm:$0xff]
    %v72 = vld [vmem:[#allocation2 + $0x28] sm:$0xff]
    %v73 = vld [vmem:[#allocation2 + $0x30] sm:$0xff]
    %v74 = vld [vmem:[#allocation2 + $0x38] sm:$0xff]
    %v75 = vld [vmem:[#allocation2 + $0x40] sm:$0xff]
    %v76 = vld [vmem:[#allocation2 + $0x48] sm:$0xff]
    %v77 = vld [vmem:[#allocation2 + $0x50] sm:$0xff]
    %v78 = vld [vmem:[#allocation2 + $0x58] sm:$0xff]
    %v79 = vld [vmem:[#allocation2 + $0x60] sm:$0xff]
    %v80 = vld [vmem:[#allocation2 + $0x68] sm:$0xff]
    %v81 = vld [vmem:[#allocation2 + $0x70] sm:$0xff]
    %v82 = vld [vmem:[#allocation2 + $0x78] sm:$0xff]
    %v83 = vld [vmem:[#allocation3] sm:$0xff]
    %v84 = vld [vmem:[#allocation3 + $0x8] sm:$0xff]
    %v85 = vld [vmem:[#allocation3 + $0x10] sm:$0xff]
    %v86 = vld [vmem:[#allocation3 + $0x18] sm:$0xff]
    %v87 = vld [vmem:[#allocation3 + $0x20] sm:$0xff]
    %v88 = vld [vmem:[#allocation3 + $0x28] sm:$0xff]
    %v89 = vld [vmem:[#allocation3 + $0x30] sm:$0xff]
    %v90 = vld [vmem:[#allocation3 + $0x38] sm:$0xff]
    %v91 = vld [vmem:[#allocation3 + $0x40] sm:$0xff]
    %v92 = vld [vmem:[#allocation3 + $0x48] sm:$0xff]
    %v93 = vld [vmem:[#allocation3 + $0x50] sm:$0xff]
    %v94 = vld [vmem:[#allocation3 + $0x58] sm:$0xff]
    %v95 = vld [vmem:[#allocation3 + $0x60] sm:$0xff]
    %v96 = vld [vmem:[#allocation3 + $0x68] sm:$0xff]
    %v97 = vld [vmem:[#allocation3 + $0x70] sm:$0xff]
    %v98 = vld [vmem:[#allocation3 + $0x78] sm:$0xff]
    %v99 = vld [vmem:[#allocation6] sm:$0xff]
    %v100 = vld [vmem:[#allocation6 + $0x8] sm:$0xff]
    %v101 = vld [vmem:[#allocation6 + $0x10] sm:$0xff]
    %v102 = vld [vmem:[#allocation6 + $0x18] sm:$0xff]
    %v103 = vld [vmem:[#allocation6 + $0x20] sm:$0xff]
    %v104 = vld [vmem:[#allocation6 + $0x28] sm:$0xff]
    %v105 = vld [vmem:[#allocation6 + $0x30] sm:$0xff]
    %v106 = vld [vmem:[#allocation6 + $0x38] sm:$0xff]
    %v107 = vld [vmem:[#allocation6 + $0x40] sm:$0xff]
    %v108 = vld [vmem:[#allocation6 + $0x48] sm:$0xff]
    %v109 = vld [vmem:[#allocation6 + $0x50] sm:$0xff]
    %v110 = vld [vmem:[#allocation6 + $0x58] sm:$0xff]
    %v111 = vld [vmem:[#allocation6 + $0x60] sm:$0xff]
    %v112 = vld [vmem:[#allocation6 + $0x68] sm:$0xff]
    %v113 = vld [vmem:[#allocation6 + $0x70] sm:$0xff]
    %v114 = vld [vmem:[#allocation6 + $0x78] sm:$0xff]
    %115 = vmatpush.msra.mxu0 %v114
    %116 = vmatpush.msra.mxu0 %v113
    %117 = vmatpush.msra.mxu0 %v112
    %118 = vmatpush.msra.mxu0 %v111
    %119 = vmatpush.msra.mxu0 %v110
    %120 = vmatpush.msra.mxu0 %v109
    %121 = vmatpush.msra.mxu0 %v108
    %122 = vmatpush.msra.mxu0 %v107
    %123 = vmatpush.msra.mxu0 %v106
    %124 = vmatpush.msra.mxu0 %v105
    %125 = vmatpush.msra.mxu0 %v104
    %126 = vmatpush.msra.mxu0 %v103
    %127 = vmatpush.msra.mxu0 %v102
    %128 = vmatpush.msra.mxu0 %v101
    %129 = vmatpush.msra.mxu0 %v100
    %130 = vmatpush.msra.mxu0 %v99
    %131 = vmatmul.f32.gmra.mxu0 %v83
    %v132 = vpop.f32.mrf.mxu0
    %v133 = vadd.f32 0.0, %v132
    %134 = vmatmul.f32.gmra.mxu0 %v84
    %v135 = vpop.f32.mrf.mxu0
    %v136 = vadd.f32 0.0, %v135
    %137 = vmatmul.f32.gmra.mxu0 %v85
    %v138 = vpop.f32.mrf.mxu0
    %v139 = vadd.f32 0.0, %v138
    %140 = vmatmul.f32.gmra.mxu0 %v86
    %v141 = vpop.f32.mrf.mxu0
    %v142 = vadd.f32 0.0, %v141
    %143 = vmatmul.f32.gmra.mxu0 %v87
    %v144 = vpop.f32.mrf.mxu0
    %v145 = vadd.f32 0.0, %v144
    %146 = vmatmul.f32.gmra.mxu0 %v88
    %v147 = vpop.f32.mrf.mxu0
    %v148 = vadd.f32 0.0, %v147
    %149 = vmatmul.f32.gmra.mxu0 %v89
    %v150 = vpop.f32.mrf.mxu0
    %v151 = vadd.f32 0.0, %v150
    %152 = vmatmul.f32.gmra.mxu0 %v90
    %v153 = vpop.f32.mrf.mxu0
    %v154 = vadd.f32 0.0, %v153
    %155 = vmatmul.f32.gmra.mxu0 %v91
    %v156 = vpop.f32.mrf.mxu0
    %v157 = vadd.f32 0.0, %v156
    %158 = vmatmul.f32.gmra.mxu0 %v92
    %v159 = vpop.f32.mrf.mxu0
    %v160 = vadd.f32 0.0, %v159
    %161 = vmatmul.f32.gmra.mxu0 %v93
    %v162 = vpop.f32.mrf.mxu0
    %v163 = vadd.f32 0.0, %v162
    %164 = vmatmul.f32.gmra.mxu0 %v94
    %v165 = vpop.f32.mrf.mxu0
    %v166 = vadd.f32 0.0, %v165
    %167 = vmatmul.f32.gmra.mxu0 %v95
    %v168 = vpop.f32.mrf.mxu0
    %v169 = vadd.f32 0.0, %v168
    %170 = vmatmul.f32.gmra.mxu0 %v96
    %v171 = vpop.f32.mrf.mxu0
    %v172 = vadd.f32 0.0, %v171
    %173 = vmatmul.f32.gmra.mxu0 %v97
    %v174 = vpop.f32.mrf.mxu0
    %v175 = vadd.f32 0.0, %v174
    %176 = vmatmul.f32.gmra.mxu0 %v98
    %v177 = vpop.f32.mrf.mxu0
    %v178 = vadd.f32 0.0, %v177
    %179 = vdwg.mxu0
    %v180 = vadd.f32 %v67, %v133
    %v181 = vadd.f32 %v68, %v136
    %v182 = vadd.f32 %v69, %v139
    %v183 = vadd.f32 %v70, %v142
    %v184 = vadd.f32 %v71, %v145
    %v185 = vadd.f32 %v72, %v148
    %v186 = vadd.f32 %v73, %v151
    %v187 = vadd.f32 %v74, %v154
    %v188 = vadd.f32 %v75, %v157
    %v189 = vadd.f32 %v76, %v160
    %v190 = vadd.f32 %v77, %v163
    %v191 = vadd.f32 %v78, %v166
    %v192 = vadd.f32 %v79, %v169
    %v193 = vadd.f32 %v80, %v172
    %v194 = vadd.f32 %v81, %v175
    %v195 = vadd.f32 %v82, %v178
    %196 = vst [vmem:[#allocation2] sm:$0xff] %v180
    %197 = vst [vmem:[#allocation2 + $0x8] sm:$0xff] %v181
    %198 = vst [vmem:[#allocation2 + $0x10] sm:$0xff] %v182
    %199 = vst [vmem:[#allocation2 + $0x18] sm:$0xff] %v183
    %200 = vst [vmem:[#allocation2 + $0x20] sm:$0xff] %v184
    %201 = vst [vmem:[#allocation2 + $0x28] sm:$0xff] %v185
    %202 = vst [vmem:[#allocation2 + $0x30] sm:$0xff] %v186
    %203 = vst [vmem:[#allocation2 + $0x38] sm:$0xff] %v187
    %204 = vst [vmem:[#allocation2 + $0x40] sm:$0xff] %v188
    %205 = vst [vmem:[#allocation2 + $0x48] sm:$0xff] %v189
    %206 = vst [vmem:[#allocation2 + $0x50] sm:$0xff] %v190
    %207 = vst [vmem:[#allocation2 + $0x58] sm:$0xff] %v191
    %208 = vst [vmem:[#allocation2 + $0x60] sm:$0xff] %v192
    %209 = vst [vmem:[#allocation2 + $0x68] sm:$0xff] %v193
    %210 = vst [vmem:[#allocation2 + $0x70] sm:$0xff] %v194
    %211 = vst [vmem:[#allocation2 + $0x78] sm:$0xff] %v195
    // Predicated region
    $region26: #{tpu_custom_call.1} parent=1 // pred_check
      %p212 = pneg %p47
    $region27: #{tpu_custom_call.1} parent=1 // pred_check_branch
      %214 = sbr.rel (%p212) target = $region29
    $region28: #{tpu_custom_call.1} parent=1 // pred_region
      %v215 = vld [vmem:[#allocation2] sm:$0xff]
      %v216 = vld [vmem:[#allocation2 + $0x8] sm:$0xff]
      %v217 = vld [vmem:[#allocation2 + $0x10] sm:$0xff]
      %v218 = vld [vmem:[#allocation2 + $0x18] sm:$0xff]
      %v219 = vld [vmem:[#allocation2 + $0x20] sm:$0xff]
      %v220 = vld [vmem:[#allocation2 + $0x28] sm:$0xff]
      %v221 = vld [vmem:[#allocation2 + $0x30] sm:$0xff]
      %v222 = vld [vmem:[#allocation2 + $0x38] sm:$0xff]
      %v223 = vld [vmem:[#allocation2 + $0x40] sm:$0xff]
      %v224 = vld [vmem:[#allocation2 + $0x48] sm:$0xff]
      %v225 = vld [vmem:[#allocation2 + $0x50] sm:$0xff]
      %v226 = vld [vmem:[#allocation2 + $0x58] sm:$0xff]
      %v227 = vld [vmem:[#allocation2 + $0x60] sm:$0xff]
      %v228 = vld [vmem:[#allocation2 + $0x68] sm:$0xff]
      %v229 = vld [vmem:[#allocation2 + $0x70] sm:$0xff]
      %v230 = vld [vmem:[#allocation2 + $0x78] sm:$0xff]
      %v231 = vld [vmem:[%s2] sm:$0x1]
      %v233 = vperm.slane %v231, 0
      %v235 = vadd.f32 %v215, %v233
      %v236 = vadd.f32 %v216, %v233
      %v237 = vadd.f32 %v217, %v233
      %v238 = vadd.f32 %v218, %v233
      %v239 = vadd.f32 %v219, %v233
      %v240 = vadd.f32 %v220, %v233
      %v241 = vadd.f32 %v221, %v233
      %v242 = vadd.f32 %v222, %v233
      %v243 = vadd.f32 %v223, %v233
      %v244 = vadd.f32 %v224, %v233
      %v245 = vadd.f32 %v225, %v233
      %v246 = vadd.f32 %v226, %v233
      %v247 = vadd.f32 %v227, %v233
      %v248 = vadd.f32 %v228, %v233
      %v249 = vadd.f32 %v229, %v233
      %v250 = vadd.f32 %v230, %v233
      %251 = vst [vmem:[#allocation8] sm:$0xff] %v235
      %252 = vst [vmem:[#allocation8 + $0x8] sm:$0xff] %v236
      %253 = vst [vmem:[#allocation8 + $0x10] sm:$0xff] %v237
      %254 = vst [vmem:[#allocation8 + $0x18] sm:$0xff] %v238
      %255 = vst [vmem:[#allocation8 + $0x20] sm:$0xff] %v239
      %256 = vst [vmem:[#allocation8 + $0x28] sm:$0xff] %v240
      %257 = vst [vmem:[#allocation8 + $0x30] sm:$0xff] %v241
      %258 = vst [vmem:[#allocation8 + $0x38] sm:$0xff] %v242
      %259 = vst [vmem:[#allocation8 + $0x40] sm:$0xff] %v243
      %260 = vst [vmem:[#allocation8 + $0x48] sm:$0xff] %v244
      %261 = vst [vmem:[#allocation8 + $0x50] sm:$0xff] %v245
      %262 = vst [vmem:[#allocation8 + $0x58] sm:$0xff] %v246
      %263 = vst [vmem:[#allocation8 + $0x60] sm:$0xff] %v247
      %264 = vst [vmem:[#allocation8 + $0x68] sm:$0xff] %v248
      %265 = vst [vmem:[#allocation8 + $0x70] sm:$0xff] %v249
      %266 = vst [vmem:[#allocation8 + $0x78] sm:$0xff] %v250
    $region29: #{tpu_custom_call.1} parent=1 // pred_fallthru
      _
    // Predicated region
    $region30: #{tpu_custom_call.1} parent=1 // pred_check
      _
    $region31: #{tpu_custom_call.1} parent=1 // pred_check_branch
      %268 = sbr.rel (0) target = $region33
    $region32: #{tpu_custom_call.1} parent=1 // pred_region
      %270 = vsyncadd [#allocation5], 0
      %s271 = sshll.u32 [#allocation8], 4
      %s272 = int_to_ptr.vmem [resolvable:$true] %s271
      %s273 = sshll.u32 %s3, 4
      %s274 = int_to_ptr.hbm [resolvable:$true] %s273
      %279 = dma.vmem_to_hbm [thread:$0]  %s272, 2048, %s274, [#allocation5], 128, 128, 8
    $region33: #{tpu_custom_call.1} parent=1 // pred_fallthru
      _
    // Predicated region
    $region34: #{tpu_custom_call.1} parent=1 // pred_check
      _
    $region35: #{tpu_custom_call.1} parent=1 // pred_check_branch
      %281 = sbr.rel (0) target = $region37
    $region36: #{tpu_custom_call.1} parent=1 // pred_region
      %283 = dma.done [#allocation5], 2048
    $region37: #{tpu_custom_call.1} parent=1 // pred_fallthru
      _
    %284 = vsyncpa [#allocation4], 1
    %285 = vsyncpa [#allocation7], 1
    %286 = vsyncpa [#allocation5], 1

</llo_original>
